<compile_context>
chip_gen: v5e
topology: v5e:2x2
jax: 0.10.0
libtpu: 0.0.40
codegen_flags: <defaults>
</compile_context>

<pallas_src>
import functools

import jax
import jax.numpy as jnp
from jax.experimental import pallas as pl
from jax.experimental.pallas import tpu as pltpu

LANE = 128


def _round_up(x, m):
    return ((x + m - 1) // m) * m


def _divisor_tile(np_, target):
    """Largest multiple of 128 <= target that divides np_ (np_ is a multiple of 128)."""
    t = max(min(target, np_), LANE)
    t -= t % LANE
    t = max(t, LANE)
    while t > LANE and np_ % t:
        t -= LANE
    return t


def _vmem_budget_and_tile_target():
    """Generation-aware VMEM budget (bytes) and k-tile target."""
    try:
        kind = jax.devices()[0].device_kind.lower()
    except Exception:  # pragma: no cover
        kind = ""
    if "v5" in kind or "v6" in kind:
        # 128 MiB physical VMEM: bigger k tiles amortize the ~0.35us per-step overhead.
        return 100 * 1024 * 1024, 1024
    # v7x has 64 MiB physical VMEM (unknown devices treated conservatively).
    return 48 * 1024 * 1024, 512


def _vmem_estimate(num_rel, num_bases, np_, d_out_pad, tm, tk, out_bytes):
    a_tiles = 2 * num_rel * tm * tk * 2            # bf16 A tile, double-buffered
    xw_res = 2 * num_bases * np_ * d_out_pad * 2   # resident XW (conservatively x2 buffers)
    out_blk = 2 * tm * d_out_pad * out_bytes       # output block, double-buffered
    acc = tm * d_out_pad * 4                       # f32 accumulator scratch
    temps = 3 * tm * tk * 4                        # f32 a~ build temporaries
    return a_tiles + xw_res + out_blk + acc + temps


def _choose_tiles(np_, num_rel, num_bases, d_out_pad, out_bytes, budget, tk_target):
    # Keep >= 2 row tiles when possible so the "parallel" axis can split across
    # v7x's two TensorCores.
    tm = _divisor_tile(np_, min(512, max(LANE, np_ // 2)))
    tk = _divisor_tile(np_, tk_target)
    while (_vmem_estimate(num_rel, num_bases, np_, d_out_pad, tm, tk, out_bytes)
           > budget and (tm > LANE or tk > LANE)):
        if tk >= tm and tk > LANE:
            tk = _divisor_tile(np_, tk - LANE)
        elif tm > LANE:
            tm = _divisor_tile(np_, tm - LANE)
        else:
            break
    # TODO(synk): if the resident XW alone exceeds the budget (huge N * d_out),
    # fall back to streaming XW per k tile instead of keeping it resident.
    return tm, tk


# ---------------------------------------------------------------------------
# Kernel: out = sum_b (sum_r w_rel[r,b] * A_r) @ XW_b
# ---------------------------------------------------------------------------
def _rgcn_layer_kernel(w_rel_ref, a_ref, xw_ref, o_ref, acc_ref, *,
                       num_rel, num_bases, tk, apply_relu):
    """grid = (row tiles i [parallel], k tiles over the node/contraction dim [arbitrary]).

    w_rel_ref: (R*B,) f32 in SMEM     relation -> basis coefficients
    a_ref:     (R, tm, tk) bf16       A tile, all relations
    xw_ref:    (B, Np, Dp) bf16       VMEM-resident X @ W_b (whole array, DMA'd once)
    o_ref:     (tm, Dp) bf16 / f32
    acc_ref:   (tm, Dp) f32 scratch   reduction over k and bases
    """
    k = pl.program_id(1)
    nk = pl.num_programs(1)

    @pl.when(k == 0)
    def _():
        acc_ref[...] = jnp.zeros_like(acc_ref)

    k_off = pl.multiple_of(k * tk, tk)
    for b in range(num_bases):
        # Fold w_rel into A on the VPU in f32 (VALU slots have slack in an
        # HBM-bound kernel, so these MACs are effectively free filler).
        at = w_rel_ref[b] * a_ref[0].astype(jnp.float32)
        for r in range(1, num_rel):
            at += w_rel_ref[r * num_bases + b] * a_ref[r].astype(jnp.float32)
        xw_b = xw_ref[b, pl.ds(k_off, tk), :]
        acc_ref[...] += jnp.dot(at.astype(xw_b.dtype), xw_b,
                                preferred_element_type=jnp.float32)

    @pl.when(k == nk - 1)
    def _():
        out = acc_ref[...]
        if apply_relu:
            out = jnp.maximum(out, 0.0)
        o_ref[...] = out.astype(o_ref.dtype)


def rgcn_layer(a_pad, w_rel_flat, xw, *, tm, tk, apply_relu, out_dtype,
               vmem_limit_bytes):
    """a_pad: (R, Np, Np) bf16, w_rel_flat: (R*B,) f32, xw: (B, Np, Dp) bf16."""
    num_rel, np_, _ = a_pad.shape
    num_bases, _, d_out_pad = xw.shape
    kernel = functools.partial(_rgcn_layer_kernel, num_rel=num_rel,
                               num_bases=num_bases, tk=tk, apply_relu=apply_relu)
    return pl.pallas_call(
        kernel,
        out_shape=jax.ShapeDtypeStruct((np_, d_out_pad), out_dtype),
        grid_spec=pltpu.PrefetchScalarGridSpec(
            num_scalar_prefetch=0,
            grid=(np_ // tm, np_ // tk),
            in_specs=[
                # relation->basis coefficients: whole (tiny) array in SMEM
                pl.BlockSpec(memory_space=pltpu.MemorySpace.SMEM),
                # A tile: all relations for (row tile i, k tile)
                pl.BlockSpec((num_rel, tm, tk), lambda i, k: (0, i, k)),
                # XW: full array, constant index map -> VMEM-resident, DMA'd once
                pl.BlockSpec((num_bases, np_, d_out_pad), lambda i, k: (0, 0, 0)),
            ],
            out_specs=pl.BlockSpec((tm, d_out_pad), lambda i, k: (i, 0)),
            scratch_shapes=[pltpu.VMEM((tm, d_out_pad), jnp.float32)],
        ),
        compiler_params=pltpu.CompilerParams(
            dimension_semantics=("parallel", "arbitrary"),
            vmem_limit_bytes=vmem_limit_bytes,
        ),
    )(w_rel_flat, a_pad, xw)


# ---------------------------------------------------------------------------
# Model wrapper (mirrors RelationalGraphConvModel, featureless, bias=False, eval)
# ---------------------------------------------------------------------------
class RelationalGraphConvModelPallas:
    """Featureless first layer requires input_size == num_nodes (X == identity),
    the same implicit assumption as the PyTorch module."""

    def __init__(self, input_size, hidden_size, output_size, num_bases,
                 num_rel, num_layer, dropout, key, compute_dtype=jnp.bfloat16):
        self.num_layer = num_layer
        self.num_rel = num_rel
        self.output_size = output_size
        self.dropout = dropout  # TODO(synk): training-mode dropout via pltpu PRNG; eval mode here.
        self.compute_dtype = compute_dtype
        self.params = []
        dims = []
        for i in range(num_layer):
            if i == 0:
                dims.append((input_size, hidden_size))
            elif i == num_layer - 1:
                dims.append((hidden_size, output_size))
            else:
                dims.append((hidden_size, hidden_size))
        for (d_in, d_out) in dims:
            key, k1, k2 = jax.random.split(key, 3)
            lim_b = (6.0 / (d_in + d_out)) ** 0.5
            w_bases = jax.random.uniform(k1, (num_bases, d_in, d_out),
                                         jnp.float32, -lim_b, lim_b)
            lim_r = (6.0 / (num_rel + num_bases)) ** 0.5
            w_rel = jax.random.uniform(k2, (num_rel, num_bases),
                                       jnp.float32, -lim_r, lim_r)
            self.params.append((w_bases, w_rel))

    def __call__(self, A):
        R, N, _ = A.shape
        cdt = self.compute_dtype
        np_ = _round_up(N, LANE)
        # One-time pad + bf16 cast of the adjacency stack (dominant HBM stream).
        a_pad = jnp.zeros((R, np_, np_), cdt).at[:, :N, :N].set(A.astype(cdt))
        budget, tk_target = _vmem_budget_and_tile_target()

        x = None
        out = None
        for i, (w_bases, w_rel) in enumerate(self.params):
            last = i == self.num_layer - 1
            nb, d_in, d_out = w_bases.shape
            # Lane-dense stores (multiple of 128).  Padding to 256 on v6e/v7x for
            # full MXU width is only worthwhile once the kernel is compute-bound.
            d_out_pad = _round_up(d_out, LANE)
            if x is None:
                # Featureless first layer: X == I  =>  X @ W_b == W_b
                # (no eye(N) materialization, no extra matmul).
                assert d_in == N, (
                    "featureless first layer requires input_size == num_nodes")
                xw = jnp.zeros((nb, np_, d_out_pad), jnp.float32)
                xw = xw.at[:, :N, :d_out].set(w_bases).astype(cdt)
            else:
                d_in_pad = x.shape[1]
                wb = jnp.zeros((nb, d_in_pad, d_out_pad), jnp.float32)
                wb = wb.at[:, :d_in, :d_out].set(w_bases).astype(cdt)
                # Tiny reassociated matmul XW_b = X @ W_b (O(N d_in d_out) flops,
                # negligible vs the O(N^2) kernel); keeps the kernel single-matmul.
                xw = jnp.einsum('nd,bdo->bno', x, wb,
                                preferred_element_type=jnp.float32).astype(cdt)
            out_dtype = jnp.float32 if last else cdt
            tm, tk = _choose_tiles(np_, R, nb, d_out_pad,
                                   jnp.dtype(out_dtype).itemsize, budget, tk_target)
            out = rgcn_layer(a_pad, w_rel.reshape(-1).astype(jnp.float32), xw,
                             tm=tm, tk=tk, apply_relu=not last,
                             out_dtype=out_dtype, vmem_limit_bytes=budget)
            # bf16 padded activations feed the next layer directly (no extra cast pass).
            x = out
            # F.dropout in eval mode is identity -> nothing to do.
        return out[:N, :self.output_size]

    # Pure-JAX reference.  exact_f32=False mirrors the kernel's bf16 rounding
    # points (tight check); exact_f32=True is the true f32 semantics of the
    # PyTorch module (loose check).
    def reference(self, A, exact_f32=False):
        f32 = jnp.float32
        cdt = f32 if exact_f32 else self.compute_dtype
        a_c = A.astype(cdt).astype(f32)
        x = None
        out = None
        for i, (w_bases, w_rel) in enumerate(self.params):
            last = i == self.num_layer - 1
            at = jnp.einsum('rb,rnm->bnm', w_rel, a_c)          # fold w_rel into A
            at = at.astype(cdt).astype(f32)
            if x is None:
                xw = w_bases.astype(cdt).astype(f32)
            else:
                xw = jnp.einsum('nd,bdo->bno', x, w_bases.astype(cdt).astype(f32))
                xw = xw.astype(cdt).astype(f32)
            out = jnp.einsum('bnm,bmo->no', at, xw)
            if not last:
                out = jnp.maximum(out, 0.0)
                x = out.astype(cdt).astype(f32)
        return out


if __name__ == "__main__":
    # Small, shape-consistent config: featureless first layer => input_size == N.
    N = 16
    num_rel = 4
    num_bases = 2
    input_size = N
    hidden_size = 32
    output_size = 8
    num_layer = 3
    dropout = 0.5  # identity in eval mode

    key = jax.random.PRNGKey(0)
    key, k_a = jax.random.split(key)
    A = jax.random.uniform(k_a, (num_rel, N, N), jnp.float32, 0.0, 1.0)
    A = A / jnp.sum(A, axis=-1, keepdims=True)  # row-normalized adjacency

    model = RelationalGraphConvModelPallas(
        input_size, hidden_size, output_size, num_bases,
        num_rel, num_layer, dropout, key)

    out = jax.block_until_ready(model(A))
    assert out.shape == (N, output_size), out.shape

    ref_mirror = model.reference(A)                 # mirrors bf16 rounding points
    assert jnp.allclose(out, ref_mirror, atol=1e-2, rtol=1e-2), (
        float(jnp.max(jnp.abs(out - ref_mirror))))
    ref_f32 = model.reference(A, exact_f32=True)    # true f32 module semantics
    assert jnp.allclose(out, ref_f32, atol=5e-2, rtol=5e-2), (
        float(jnp.max(jnp.abs(out - ref_f32))))

    print("KERNEL_OK")
</pallas_src>

<mosaic_0001>
module attributes {stable_mosaic.version = 11 : i64} {
  func.func @_rgcn_layer_kernel(%arg0: i32, %arg1: i32, %arg2: memref<8xf32, #tpu.memory_space<smem>>, %arg3: memref<4x128x128xbf16, #tpu.memory_space<vmem>>, %arg4: memref<2x128x128xbf16, #tpu.memory_space<vmem>>, %arg5: memref<128x128xbf16, #tpu.memory_space<vmem>>, %arg6: memref<128x128xf32, #tpu.memory_space<vmem>>) attributes {dimension_semantics = [#tpu.dimension_semantics<parallel>, #tpu.dimension_semantics<arbitrary>], iteration_bounds = array<i64: 1, 1>, scalar_prefetch = 0 : i64, scratch_operands = 1 : i64, tpu.core_type = #tpu.core_type<tc>, window_params = [{transform_indices = @transform_0, window_bounds = array<i64: 8>}, {transform_indices = @transform_1, window_bounds = array<i64: 4, 128, 128>}, {pipeline_mode = #tpu.pipeline_mode<synchronous>, transform_indices = @transform_2, window_bounds = array<i64: 2, 128, 128>}, {transform_indices = @transform_3, window_bounds = array<i64: 128, 128>}]} {
    %c0_i32 = arith.constant 0 : i32
    %0 = arith.cmpi eq, %arg1, %c0_i32 : i32
    %1 = arith.extui %0 : i1 to i32
    %c0_i32_0 = arith.constant 0 : i32
    %2 = arith.cmpi ne, %1, %c0_i32_0 : i32
    scf.if %2 {
      %cst_40 = arith.constant 0.000000e+00 : f32
      %78 = vector.broadcast %cst_40 : f32 to vector<128x128xf32>
      %c0_41 = arith.constant 0 : index
      %c0_42 = arith.constant 0 : index
      %79 = vector.load %arg6[%c0_41, %c0_42] : memref<128x128xf32, #tpu.memory_space<vmem>>, vector<128x128xf32>
      tpu.vector_store %arg6[%c0_41, %c0_42], %78 {strides = array<i32>} : memref<128x128xf32, #tpu.memory_space<vmem>>, vector<128x128xf32>,
    } else {
    }
    %c128_i32 = arith.constant 128 : i32
    %3 = arith.muli %arg1, %c128_i32 : i32
    %4 = tpu.assume_multiple %3, 128 : i32
    %c0 = arith.constant 0 : index
    %5 = memref.load %arg2[%c0] : memref<8xf32, #tpu.memory_space<smem>>
    %c0_1 = arith.constant 0 : index
    %c0_2 = arith.constant 0 : index
    %c0_3 = arith.constant 0 : index
    %6 = vector.load %arg3[%c0_1, %c0_2, %c0_3] : memref<4x128x128xbf16, #tpu.memory_space<vmem>>, vector<1x128x128xbf16>
    %7 = vector.shape_cast %6 : vector<1x128x128xbf16> to vector<128x128xbf16>
    %8 = arith.extf %7 : vector<128x128xbf16> to vector<128x128xf32>
    %9 = vector.broadcast %5 : f32 to vector<128x128xf32>
    %10 = arith.mulf %9, %8 : vector<128x128xf32>
    %c2 = arith.constant 2 : index
    %11 = memref.load %arg2[%c2] : memref<8xf32, #tpu.memory_space<smem>>
    %c1 = arith.constant 1 : index
    %c0_4 = arith.constant 0 : index
    %c0_5 = arith.constant 0 : index
    %12 = vector.load %arg3[%c1, %c0_4, %c0_5] : memref<4x128x128xbf16, #tpu.memory_space<vmem>>, vector<1x128x128xbf16>
    %13 = vector.shape_cast %12 : vector<1x128x128xbf16> to vector<128x128xbf16>
    %14 = arith.extf %13 : vector<128x128xbf16> to vector<128x128xf32>
    %15 = vector.broadcast %11 : f32 to vector<128x128xf32>
    %16 = arith.mulf %15, %14 : vector<128x128xf32>
    %17 = arith.addf %10, %16 : vector<128x128xf32>
    %c4 = arith.constant 4 : index
    %18 = memref.load %arg2[%c4] : memref<8xf32, #tpu.memory_space<smem>>
    %c2_6 = arith.constant 2 : index
    %c0_7 = arith.constant 0 : index
    %c0_8 = arith.constant 0 : index
    %19 = vector.load %arg3[%c2_6, %c0_7, %c0_8] : memref<4x128x128xbf16, #tpu.memory_space<vmem>>, vector<1x128x128xbf16>
    %20 = vector.shape_cast %19 : vector<1x128x128xbf16> to vector<128x128xbf16>
    %21 = arith.extf %20 : vector<128x128xbf16> to vector<128x128xf32>
    %22 = vector.broadcast %18 : f32 to vector<128x128xf32>
    %23 = arith.mulf %22, %21 : vector<128x128xf32>
    %24 = arith.addf %17, %23 : vector<128x128xf32>
    %c6 = arith.constant 6 : index
    %25 = memref.load %arg2[%c6] : memref<8xf32, #tpu.memory_space<smem>>
    %c3 = arith.constant 3 : index
    %c0_9 = arith.constant 0 : index
    %c0_10 = arith.constant 0 : index
    %26 = vector.load %arg3[%c3, %c0_9, %c0_10] : memref<4x128x128xbf16, #tpu.memory_space<vmem>>, vector<1x128x128xbf16>
    %27 = vector.shape_cast %26 : vector<1x128x128xbf16> to vector<128x128xbf16>
    %28 = arith.extf %27 : vector<128x128xbf16> to vector<128x128xf32>
    %29 = vector.broadcast %25 : f32 to vector<128x128xf32>
    %30 = arith.mulf %29, %28 : vector<128x128xf32>
    %31 = arith.addf %24, %30 : vector<128x128xf32>
    %c0_11 = arith.constant 0 : index
    %32 = arith.index_cast %4 : i32 to index
    %c0_12 = arith.constant 0 : index
    %33 = vector.load %arg4[%c0_11, %32, %c0_12] : memref<2x128x128xbf16, #tpu.memory_space<vmem>>, vector<1x128x128xbf16>
    %34 = vector.shape_cast %33 : vector<1x128x128xbf16> to vector<128x128xbf16>
    %c0_13 = arith.constant 0 : index
    %c0_14 = arith.constant 0 : index
    %35 = vector.load %arg6[%c0_13, %c0_14] : memref<128x128xf32, #tpu.memory_space<vmem>>, vector<128x128xf32>
    %36 = arith.truncf %31 : vector<128x128xf32> to vector<128x128xbf16>
    %cst = arith.constant dense<0.000000e+00> : vector<128x128xf32>
    %37 = tpu.matmul %36, %34, %cst {dimension_numbers = #tpu.dot_dimension_numbers<[1], [0], [0], [1], [0, 0, 1, 1], [], []>} : vector<128x128xbf16>, vector<128x128xbf16>, vector<128x128xf32> -> vector<128x128xf32>
    %38 = arith.addf %35, %37 : vector<128x128xf32>
    %c0_15 = arith.constant 0 : index
    %c0_16 = arith.constant 0 : index
    %39 = vector.load %arg6[%c0_15, %c0_16] : memref<128x128xf32, #tpu.memory_space<vmem>>, vector<128x128xf32>
    tpu.vector_store %arg6[%c0_15, %c0_16], %38 {strides = array<i32>} : memref<128x128xf32, #tpu.memory_space<vmem>>, vector<128x128xf32>,
    %c1_17 = arith.constant 1 : index
    %40 = memref.load %arg2[%c1_17] : memref<8xf32, #tpu.memory_space<smem>>
    %c0_18 = arith.constant 0 : index
    %c0_19 = arith.constant 0 : index
    %c0_20 = arith.constant 0 : index
    %41 = vector.load %arg3[%c0_18, %c0_19, %c0_20] : memref<4x128x128xbf16, #tpu.memory_space<vmem>>, vector<1x128x128xbf16>
    %42 = vector.shape_cast %41 : vector<1x128x128xbf16> to vector<128x128xbf16>
    %43 = arith.extf %42 : vector<128x128xbf16> to vector<128x128xf32>
    %44 = vector.broadcast %40 : f32 to vector<128x128xf32>
    %45 = arith.mulf %44, %43 : vector<128x128xf32>
    %c3_21 = arith.constant 3 : index
    %46 = memref.load %arg2[%c3_21] : memref<8xf32, #tpu.memory_space<smem>>
    %c1_22 = arith.constant 1 : index
    %c0_23 = arith.constant 0 : index
    %c0_24 = arith.constant 0 : index
    %47 = vector.load %arg3[%c1_22, %c0_23, %c0_24] : memref<4x128x128xbf16, #tpu.memory_space<vmem>>, vector<1x128x128xbf16>
    %48 = vector.shape_cast %47 : vector<1x128x128xbf16> to vector<128x128xbf16>
    %49 = arith.extf %48 : vector<128x128xbf16> to vector<128x128xf32>
    %50 = vector.broadcast %46 : f32 to vector<128x128xf32>
    %51 = arith.mulf %50, %49 : vector<128x128xf32>
    %52 = arith.addf %45, %51 : vector<128x128xf32>
    %c5 = arith.constant 5 : index
    %53 = memref.load %arg2[%c5] : memref<8xf32, #tpu.memory_space<smem>>
    %c2_25 = arith.constant 2 : index
    %c0_26 = arith.constant 0 : index
    %c0_27 = arith.constant 0 : index
    %54 = vector.load %arg3[%c2_25, %c0_26, %c0_27] : memref<4x128x128xbf16, #tpu.memory_space<vmem>>, vector<1x128x128xbf16>
    %55 = vector.shape_cast %54 : vector<1x128x128xbf16> to vector<128x128xbf16>
    %56 = arith.extf %55 : vector<128x128xbf16> to vector<128x128xf32>
    %57 = vector.broadcast %53 : f32 to vector<128x128xf32>
    %58 = arith.mulf %57, %56 : vector<128x128xf32>
    %59 = arith.addf %52, %58 : vector<128x128xf32>
    %c7 = arith.constant 7 : index
    %60 = memref.load %arg2[%c7] : memref<8xf32, #tpu.memory_space<smem>>
    %c3_28 = arith.constant 3 : index
    %c0_29 = arith.constant 0 : index
    %c0_30 = arith.constant 0 : index
    %61 = vector.load %arg3[%c3_28, %c0_29, %c0_30] : memref<4x128x128xbf16, #tpu.memory_space<vmem>>, vector<1x128x128xbf16>
    %62 = vector.shape_cast %61 : vector<1x128x128xbf16> to vector<128x128xbf16>
    %63 = arith.extf %62 : vector<128x128xbf16> to vector<128x128xf32>
    %64 = vector.broadcast %60 : f32 to vector<128x128xf32>
    %65 = arith.mulf %64, %63 : vector<128x128xf32>
    %66 = arith.addf %59, %65 : vector<128x128xf32>
    %c1_31 = arith.constant 1 : index
    %67 = arith.index_cast %4 : i32 to index
    %c0_32 = arith.constant 0 : index
    %68 = vector.load %arg4[%c1_31, %67, %c0_32] : memref<2x128x128xbf16, #tpu.memory_space<vmem>>, vector<1x128x128xbf16>
    %69 = vector.shape_cast %68 : vector<1x128x128xbf16> to vector<128x128xbf16>
    %c0_33 = arith.constant 0 : index
    %c0_34 = arith.constant 0 : index
    %70 = vector.load %arg6[%c0_33, %c0_34] : memref<128x128xf32, #tpu.memory_space<vmem>>, vector<128x128xf32>
    %71 = arith.truncf %66 : vector<128x128xf32> to vector<128x128xbf16>
    %cst_35 = arith.constant dense<0.000000e+00> : vector<128x128xf32>
    %72 = tpu.matmul %71, %69, %cst_35 {dimension_numbers = #tpu.dot_dimension_numbers<[1], [0], [0], [1], [0, 0, 1, 1], [], []>} : vector<128x128xbf16>, vector<128x128xbf16>, vector<128x128xf32> -> vector<128x128xf32>
    %73 = arith.addf %70, %72 : vector<128x128xf32>
    %c0_36 = arith.constant 0 : index
    %c0_37 = arith.constant 0 : index
    %74 = vector.load %arg6[%c0_36, %c0_37] : memref<128x128xf32, #tpu.memory_space<vmem>>, vector<128x128xf32>
    tpu.vector_store %arg6[%c0_36, %c0_37], %73 {strides = array<i32>} : memref<128x128xf32, #tpu.memory_space<vmem>>, vector<128x128xf32>,
    %c0_i32_38 = arith.constant 0 : i32
    %75 = arith.cmpi eq, %arg1, %c0_i32_38 : i32
    %76 = arith.extui %75 : i1 to i32
    %c0_i32_39 = arith.constant 0 : i32
    %77 = arith.cmpi ne, %76, %c0_i32_39 : i32
    scf.if %77 {
      %c0_40 = arith.constant 0 : index
      %c0_41 = arith.constant 0 : index
      %78 = vector.load %arg6[%c0_40, %c0_41] : memref<128x128xf32, #tpu.memory_space<vmem>>, vector<128x128xf32>
      %cst_42 = arith.constant 0.000000e+00 : f32
      %79 = vector.broadcast %cst_42 : f32 to vector<128x128xf32>
      %80 = arith.maximumf %78, %79 : vector<128x128xf32>
      %81 = arith.truncf %80 : vector<128x128xf32> to vector<128x128xbf16>
      %c0_43 = arith.constant 0 : index
      %c0_44 = arith.constant 0 : index
      %82 = vector.load %arg5[%c0_43, %c0_44] : memref<128x128xbf16, #tpu.memory_space<vmem>>, vector<128x128xbf16>
      tpu.vector_store %arg5[%c0_43, %c0_44], %81 {strides = array<i32>} : memref<128x128xbf16, #tpu.memory_space<vmem>>, vector<128x128xbf16>,
    } else {
    }
    return
  }
  func.func @transform_0(%arg0: i32, %arg1: i32) -> i32 {
    %c0_i32 = arith.constant 0 : i32
    %c0_i32_0 = arith.constant 0 : i32
    return %c0_i32 : i32
  }
  func.func @transform_1(%arg0: i32, %arg1: i32) -> (i32, i32, i32) {
    %c0_i32 = arith.constant 0 : i32
    %c0_i32_0 = arith.constant 0 : i32
    return %c0_i32, %arg0, %arg1 : i32, i32, i32
  }
  func.func @transform_2(%arg0: i32, %arg1: i32) -> (i32, i32, i32) {
    %c0_i32 = arith.constant 0 : i32
    %c0_i32_0 = arith.constant 0 : i32
    %c0_i32_1 = arith.constant 0 : i32
    %c0_i32_2 = arith.constant 0 : i32
    return %c0_i32, %c0_i32_0, %c0_i32_1 : i32, i32, i32
  }
  func.func @transform_3(%arg0: i32, %arg1: i32) -> (i32, i32) {
    %c0_i32 = arith.constant 0 : i32
    %c0_i32_0 = arith.constant 0 : i32
    return %arg0, %c0_i32 : i32, i32
  }
}

</mosaic_0001>

<llo_original>
// kernel: tpu_custom_call.1
$region0: #{tpu_custom_call.1}
  #allocation0 [shape = 'u32[]', space=smem, size = 0x4, offset = 0x4, fixed_abs, tag = 'smem constant byte address 0x4 - core index']
  #allocation1 [shape = 'u32[72,128]{1,0:T(1,128)}', space=vmem, size = 0x9000, scoped, tag = 'internal scratch']
  #allocation2 [shape = 'f32[128,128]{1,0:T(8,128)}', space=vmem, size = 0x10000, scoped, tag = 'scratch operand']
  %s0 = inlined_call_operand.hbm [shape: f32[8], index: 0, kind: input, shape index: {}]
  %s1 = inlined_call_operand.hbm [shape: bf16[4,128,128], index: 1, kind: input, shape index: {}]
  %s2 = inlined_call_operand.hbm [shape: bf16[2,128,128], index: 2, kind: input, shape index: {}]
  %s3 = inlined_call_operand.hbm [shape: bf16[128,128], index: 3, kind: output, shape index: {}]
  %s4 = sld [smem:[#allocation0]]
  $region42: #{tpu_custom_call.1} parent=0
    _
  %s6 = ssub.s32 1, %s4
  %s7 = scalar_select 0, %s6, %s4
  $region1: #{tpu_custom_call.1} parent=0
    #allocation3 [shape = 'u8[512]{0}', space=smem, size = 0x200, scoped, tag = 'input window, operand 0, single buffered']
    #allocation4 [shape = 's32[1]{0}', space=sflag, size = 0x4, scoped, tag = 'scoped memory for tpu_custom_call.1']
    #allocation5 [shape = 's32[1]{0}', space=sflag, size = 0x4, scoped, tag = 'scoped memory for tpu_custom_call.1']
    #allocation6 [shape = 's32[1]{0}', space=sflag, size = 0x4, scoped, tag = 'scoped memory for tpu_custom_call.1']
    #allocation7 [shape = 'u8[131072]{0}', space=vmem, size = 0x20000, scoped, tag = 'input window, operand 1, single buffered']
    #allocation8 [shape = 'u8[65536]{0}', space=vmem, size = 0x10000, scoped, tag = 'input window, operand 2, single buffered']
    #allocation9 [shape = 's32[1]{0}', space=sflag, size = 0x4, scoped, tag = 'scoped memory for tpu_custom_call.1']
    #allocation10 [shape = 'u8[32768]{0}', space=vmem, size = 0x8000, scoped, tag = 'output window, operand 0, single buffered']
    %8 = vsyncpa [#allocation6], 0
    %9 = vsyncpa [#allocation4], 0
    %10 = vsyncpa [#allocation9], 0
    %11 = vsyncpa [#allocation5], 0
    // Predicated region
    $region2: #{tpu_custom_call.1} parent=1 // pred_check
      _
    $region3: #{tpu_custom_call.1} parent=1 // pred_check_branch
      %13 = sbr.rel (0) target = $region5
    $region4: #{tpu_custom_call.1} parent=1 // pred_region
      %15 = vsyncadd [#allocation6], 0
      %s17 = sshll.u32 %s0, 4
      %s18 = int_to_ptr.hbm [resolvable:$true] %s17
      %20 = dma.hbm_to_smem %s18, 16, [#allocation3], [#allocation6]
    $region5: #{tpu_custom_call.1} parent=1 // pred_fallthru
      _
    // Predicated region
    $region6: #{tpu_custom_call.1} parent=1 // pred_check
      _
    $region7: #{tpu_custom_call.1} parent=1 // pred_check_branch
      %22 = sbr.rel (0) target = $region9
    $region8: #{tpu_custom_call.1} parent=1 // pred_region
      %24 = vsyncadd [#allocation4], 0
      %s25 = sshll.u32 %s1, 4
      %s26 = int_to_ptr.hbm [resolvable:$true] %s25
      %s27 = sshll.u32 [#allocation7], 4
      %s28 = int_to_ptr.vmem [resolvable:$true] %s27
      %33 = dma.hbm_to_vmem [thread:$0]  %s26, 4096, %s28, [#allocation4], 64, 64, 4
    $region9: #{tpu_custom_call.1} parent=1 // pred_fallthru
      _
    // Predicated region
    $region10: #{tpu_custom_call.1} parent=1 // pred_check
      _
    $region11: #{tpu_custom_call.1} parent=1 // pred_check_branch
      %35 = sbr.rel (0) target = $region13
    $region12: #{tpu_custom_call.1} parent=1 // pred_region
      %37 = vsyncadd [#allocation9], 0
      %s38 = sshll.u32 %s2, 4
      %s39 = int_to_ptr.hbm [resolvable:$true] %s38
      %s40 = sshll.u32 [#allocation8], 4
      %s41 = int_to_ptr.vmem [resolvable:$true] %s40
      %46 = dma.hbm_to_vmem [thread:$0]  %s39, 2048, %s41, [#allocation9], 64, 64, 4
    $region13: #{tpu_custom_call.1} parent=1 // pred_fallthru
      _
    // Predicated region
    $region14: #{tpu_custom_call.1} parent=1 // pred_check
      _
    $region15: #{tpu_custom_call.1} parent=1 // pred_check_branch
      %48 = sbr.rel (0) target = $region17
    $region16: #{tpu_custom_call.1} parent=1 // pred_region
      %50 = dma.done [#allocation6], 16
    $region17: #{tpu_custom_call.1} parent=1 // pred_fallthru
      _
    // Predicated region
    $region18: #{tpu_custom_call.1} parent=1 // pred_check
      _
    $region19: #{tpu_custom_call.1} parent=1 // pred_check_branch
      %52 = sbr.rel (0) target = $region21
    $region20: #{tpu_custom_call.1} parent=1 // pred_region
      %54 = dma.done [#allocation4], 4096
    $region21: #{tpu_custom_call.1} parent=1 // pred_fallthru
      _
    // Predicated region
    $region22: #{tpu_custom_call.1} parent=1 // pred_check
      _
    $region23: #{tpu_custom_call.1} parent=1 // pred_check_branch
      %56 = sbr.rel (0) target = $region25
    $region24: #{tpu_custom_call.1} parent=1 // pred_region
      %58 = dma.done [#allocation9], 2048
    $region25: #{tpu_custom_call.1} parent=1 // pred_fallthru
      _
    %59 = sfence
    %p60 = scmp.eq.s32.totalorder 0, 0
    // Predicated region
    $region26: #{tpu_custom_call.1} parent=1 // pred_check
      %p61 = pneg %p60
    $region27: #{tpu_custom_call.1} parent=1 // pred_check_branch
      %63 = sbr.rel (%p61) target = $region29
    $region28: #{tpu_custom_call.1} parent=1 // pred_region
      %64 = vst [vmem:[#allocation2] sm:$0xff] 0.0
      %65 = vst [vmem:[#allocation2 + $0x8] sm:$0xff] 0.0
      %66 = vst [vmem:[#allocation2 + $0x10] sm:$0xff] 0.0
      %67 = vst [vmem:[#allocation2 + $0x18] sm:$0xff] 0.0
      %68 = vst [vmem:[#allocation2 + $0x20] sm:$0xff] 0.0
      %69 = vst [vmem:[#allocation2 + $0x28] sm:$0xff] 0.0
      %70 = vst [vmem:[#allocation2 + $0x30] sm:$0xff] 0.0
      %71 = vst [vmem:[#allocation2 + $0x38] sm:$0xff] 0.0
      %72 = vst [vmem:[#allocation2 + $0x40] sm:$0xff] 0.0
      %73 = vst [vmem:[#allocation2 + $0x48] sm:$0xff] 0.0
      %74 = vst [vmem:[#allocation2 + $0x50] sm:$0xff] 0.0
      %75 = vst [vmem:[#allocation2 + $0x58] sm:$0xff] 0.0
      %76 = vst [vmem:[#allocation2 + $0x60] sm:$0xff] 0.0
      %77 = vst [vmem:[#allocation2 + $0x68] sm:$0xff] 0.0
      %78 = vst [vmem:[#allocation2 + $0x70] sm:$0xff] 0.0
      %79 = vst [vmem:[#allocation2 + $0x78] sm:$0xff] 0.0
    $region29: #{tpu_custom_call.1} parent=1 // pred_fallthru
      _
    %s80 = smul.u32 0, 128
    %s81 = sld [smem:[#allocation3]]
    %v82 = vld [vmem:[#allocation7] sm:$0xf]
    %v83 = vld [vmem:[#allocation7 + $0x4] sm:$0xf]
    %v84 = vld [vmem:[#allocation7 + $0x8] sm:$0xf]
    %v85 = vld [vmem:[#allocation7 + $0xc] sm:$0xf]
    %v86 = vld [vmem:[#allocation7 + $0x10] sm:$0xf]
    %v87 = vld [vmem:[#allocation7 + $0x14] sm:$0xf]
    %v88 = vld [vmem:[#allocation7 + $0x18] sm:$0xf]
    %v89 = vld [vmem:[#allocation7 + $0x1c] sm:$0xf]
    %v90 = vld [vmem:[#allocation7 + $0x20] sm:$0xf]
    %v91 = vld [vmem:[#allocation7 + $0x24] sm:$0xf]
    %v92 = vld [vmem:[#allocation7 + $0x28] sm:$0xf]
    %v93 = vld [vmem:[#allocation7 + $0x2c] sm:$0xf]
    %v94 = vld [vmem:[#allocation7 + $0x30] sm:$0xf]
    %v95 = vld [vmem:[#allocation7 + $0x34] sm:$0xf]
    %v96 = vld [vmem:[#allocation7 + $0x38] sm:$0xf]
    %v97 = vld [vmem:[#allocation7 + $0x3c] sm:$0xf]
    %v98 = vunpack.c.l.bf16 %v82
    %v99 = vunpack.c.l.bf16 %v83
    %v100 = vunpack.c.l.bf16 %v84
    %v101 = vunpack.c.l.bf16 %v85
    %v102 = vunpack.c.l.bf16 %v86
    %v103 = vunpack.c.l.bf16 %v87
    %v104 = vunpack.c.l.bf16 %v88
    %v105 = vunpack.c.l.bf16 %v89
    %v106 = vunpack.c.l.bf16 %v90
    %v107 = vunpack.c.l.bf16 %v91
    %v108 = vunpack.c.l.bf16 %v92
    %v109 = vunpack.c.l.bf16 %v93
    %v110 = vunpack.c.l.bf16 %v94
    %v111 = vunpack.c.l.bf16 %v95
    %v112 = vunpack.c.l.bf16 %v96
    %v113 = vunpack.c.l.bf16 %v97
    %v114 = vstv %s81
    %v115 = vmul.f32 %v114, %v98
    %v116 = vmul.f32 %v114, %v99
    %v117 = vmul.f32 %v114, %v100
    %v118 = vmul.f32 %v114, %v101
    %v119 = vmul.f32 %v114, %v102
    %v120 = vmul.f32 %v114, %v103
    %v121 = vmul.f32 %v114, %v104
    %v122 = vmul.f32 %v114, %v105
    %v123 = vmul.f32 %v114, %v106
    %v124 = vmul.f32 %v114, %v107
    %v125 = vmul.f32 %v114, %v108
    %v126 = vmul.f32 %v114, %v109
    %v127 = vmul.f32 %v114, %v110
    %v128 = vmul.f32 %v114, %v111
    %v129 = vmul.f32 %v114, %v112
    %v130 = vmul.f32 %v114, %v113
    %s131 = sld [smem:[#allocation3 + $0x2]]
    %s132 = scalar_lea.vmem [#allocation7], 64
    %v133 = vld [vmem:[%s132] sm:$0xf]
    %v134 = vld [vmem:[%s132 + $0x4] sm:$0xf]
    %v135 = vld [vmem:[%s132 + $0x8] sm:$0xf]
    %v136 = vld [vmem:[%s132 + $0xc] sm:$0xf]
    %v137 = vld [vmem:[%s132 + $0x10] sm:$0xf]
    %v138 = vld [vmem:[%s132 + $0x14] sm:$0xf]
    %v139 = vld [vmem:[%s132 + $0x18] sm:$0xf]
    %v140 = vld [vmem:[%s132 + $0x1c] sm:$0xf]
    %v141 = vld [vmem:[%s132 + $0x20] sm:$0xf]
    %v142 = vld [vmem:[%s132 + $0x24] sm:$0xf]
    %v143 = vld [vmem:[%s132 + $0x28] sm:$0xf]
    %v144 = vld [vmem:[%s132 + $0x2c] sm:$0xf]
    %v145 = vld [vmem:[%s132 + $0x30] sm:$0xf]
    %v146 = vld [vmem:[%s132 + $0x34] sm:$0xf]
    %v147 = vld [vmem:[%s132 + $0x38] sm:$0xf]
    %v148 = vld [vmem:[%s132 + $0x3c] sm:$0xf]
    %v149 = vunpack.c.l.bf16 %v133
    %v150 = vunpack.c.l.bf16 %v134
    %v151 = vunpack.c.l.bf16 %v135
    %v152 = vunpack.c.l.bf16 %v136
    %v153 = vunpack.c.l.bf16 %v137
    %v154 = vunpack.c.l.bf16 %v138
    %v155 = vunpack.c.l.bf16 %v139
    %v156 = vunpack.c.l.bf16 %v140
    %v157 = vunpack.c.l.bf16 %v141
    %v158 = vunpack.c.l.bf16 %v142
    %v159 = vunpack.c.l.bf16 %v143
    %v160 = vunpack.c.l.bf16 %v144
    %v161 = vunpack.c.l.bf16 %v145
    %v162 = vunpack.c.l.bf16 %v146
    %v163 = vunpack.c.l.bf16 %v147
    %v164 = vunpack.c.l.bf16 %v148
    %v165 = vstv %s131
    %v166 = vmul.f32 %v165, %v149
    %v167 = vmul.f32 %v165, %v150
    %v168 = vmul.f32 %v165, %v151
    %v169 = vmul.f32 %v165, %v152
    %v170 = vmul.f32 %v165, %v153
    %v171 = vmul.f32 %v165, %v154
    %v172 = vmul.f32 %v165, %v155
    %v173 = vmul.f32 %v165, %v156
    %v174 = vmul.f32 %v165, %v157
    %v175 = vmul.f32 %v165, %v158
    %v176 = vmul.f32 %v165, %v159
    %v177 = vmul.f32 %v165, %v160
    %v178 = vmul.f32 %v165, %v161
    %v179 = vmul.f32 %v165, %v162
    %v180 = vmul.f32 %v165, %v163
    %v181 = vmul.f32 %v165, %v164
    %v182 = vadd.f32 %v115, %v166
    %v183 = vadd.f32 %v116, %v167
    %v184 = vadd.f32 %v117, %v168
    %v185 = vadd.f32 %v118, %v169
    %v186 = vadd.f32 %v119, %v170
    %v187 = vadd.f32 %v120, %v171
    %v188 = vadd.f32 %v121, %v172
    %v189 = vadd.f32 %v122, %v173
    %v190 = vadd.f32 %v123, %v174
    %v191 = vadd.f32 %v124, %v175
    %v192 = vadd.f32 %v125, %v176
    %v193 = vadd.f32 %v126, %v177
    %v194 = vadd.f32 %v127, %v178
    %v195 = vadd.f32 %v128, %v179
    %v196 = vadd.f32 %v129, %v180
    %v197 = vadd.f32 %v130, %v181
    %s198 = sld [smem:[#allocation3 + $0x4]]
    %s199 = scalar_lea.vmem [#allocation7], 128
    %v200 = vld [vmem:[%s199] sm:$0xf]
    %v201 = vld [vmem:[%s199 + $0x4] sm:$0xf]
    %v202 = vld [vmem:[%s199 + $0x8] sm:$0xf]
    %v203 = vld [vmem:[%s199 + $0xc] sm:$0xf]
    %v204 = vld [vmem:[%s199 + $0x10] sm:$0xf]
    %v205 = vld [vmem:[%s199 + $0x14] sm:$0xf]
    %v206 = vld [vmem:[%s199 + $0x18] sm:$0xf]
    %v207 = vld [vmem:[%s199 + $0x1c] sm:$0xf]
    %v208 = vld [vmem:[%s199 + $0x20] sm:$0xf]
    %v209 = vld [vmem:[%s199 + $0x24] sm:$0xf]
    %v210 = vld [vmem:[%s199 + $0x28] sm:$0xf]
    %v211 = vld [vmem:[%s199 + $0x2c] sm:$0xf]
    %v212 = vld [vmem:[%s199 + $0x30] sm:$0xf]
    %v213 = vld [vmem:[%s199 + $0x34] sm:$0xf]
    %v214 = vld [vmem:[%s199 + $0x38] sm:$0xf]
    %v215 = vld [vmem:[%s199 + $0x3c] sm:$0xf]
    %v216 = vunpack.c.l.bf16 %v200
    %v217 = vunpack.c.l.bf16 %v201
    %v218 = vunpack.c.l.bf16 %v202
    %v219 = vunpack.c.l.bf16 %v203
    %v220 = vunpack.c.l.bf16 %v204
    %v221 = vunpack.c.l.bf16 %v205
    %v222 = vunpack.c.l.bf16 %v206
    %v223 = vunpack.c.l.bf16 %v207
    %v224 = vunpack.c.l.bf16 %v208
    %v225 = vunpack.c.l.bf16 %v209
    %v226 = vunpack.c.l.bf16 %v210
    %v227 = vunpack.c.l.bf16 %v211
    %v228 = vunpack.c.l.bf16 %v212
    %v229 = vunpack.c.l.bf16 %v213
    %v230 = vunpack.c.l.bf16 %v214
    %v231 = vunpack.c.l.bf16 %v215
    %v232 = vstv %s198
    %v233 = vmul.f32 %v232, %v216
    %v234 = vmul.f32 %v232, %v217
    %v235 = vmul.f32 %v232, %v218
    %v236 = vmul.f32 %v232, %v219
    %v237 = vmul.f32 %v232, %v220
    %v238 = vmul.f32 %v232, %v221
    %v239 = vmul.f32 %v232, %v222
    %v240 = vmul.f32 %v232, %v223
    %v241 = vmul.f32 %v232, %v224
    %v242 = vmul.f32 %v232, %v225
    %v243 = vmul.f32 %v232, %v226
    %v244 = vmul.f32 %v232, %v227
    %v245 = vmul.f32 %v232, %v228
    %v246 = vmul.f32 %v232, %v229
    %v247 = vmul.f32 %v232, %v230
    %v248 = vmul.f32 %v232, %v231
    %v249 = vadd.f32 %v182, %v233
    %v250 = vadd.f32 %v183, %v234
    %v251 = vadd.f32 %v184, %v235
    %v252 = vadd.f32 %v185, %v236
    %v253 = vadd.f32 %v186, %v237
    %v254 = vadd.f32 %v187, %v238
    %v255 = vadd.f32 %v188, %v239
    %v256 = vadd.f32 %v189, %v240
    %v257 = vadd.f32 %v190, %v241
    %v258 = vadd.f32 %v191, %v242
    %v259 = vadd.f32 %v192, %v243
    %v260 = vadd.f32 %v193, %v244
    %v261 = vadd.f32 %v194, %v245
    %v262 = vadd.f32 %v195, %v246
    %v263 = vadd.f32 %v196, %v247
    %v264 = vadd.f32 %v197, %v248
    %s265 = sld [smem:[#allocation3 + $0x6]]
    %s266 = scalar_lea.vmem [#allocation7], 192
    %v267 = vld [vmem:[%s266] sm:$0xf]
    %v268 = vld [vmem:[%s266 + $0x4] sm:$0xf]
    %v269 = vld [vmem:[%s266 + $0x8] sm:$0xf]
    %v270 = vld [vmem:[%s266 + $0xc] sm:$0xf]
    %v271 = vld [vmem:[%s266 + $0x10] sm:$0xf]
    %v272 = vld [vmem:[%s266 + $0x14] sm:$0xf]
    %v273 = vld [vmem:[%s266 + $0x18] sm:$0xf]
    %v274 = vld [vmem:[%s266 + $0x1c] sm:$0xf]
    %v275 = vld [vmem:[%s266 + $0x20] sm:$0xf]
    %v276 = vld [vmem:[%s266 + $0x24] sm:$0xf]
    %v277 = vld [vmem:[%s266 + $0x28] sm:$0xf]
    %v278 = vld [vmem:[%s266 + $0x2c] sm:$0xf]
    %v279 = vld [vmem:[%s266 + $0x30] sm:$0xf]
    %v280 = vld [vmem:[%s266 + $0x34] sm:$0xf]
    %v281 = vld [vmem:[%s266 + $0x38] sm:$0xf]
    %v282 = vld [vmem:[%s266 + $0x3c] sm:$0xf]
    %v283 = vunpack.c.l.bf16 %v267
    %v284 = vunpack.c.l.bf16 %v268
    %v285 = vunpack.c.l.bf16 %v269
    %v286 = vunpack.c.l.bf16 %v270
    %v287 = vunpack.c.l.bf16 %v271
    %v288 = vunpack.c.l.bf16 %v272
    %v289 = vunpack.c.l.bf16 %v273
    %v290 = vunpack.c.l.bf16 %v274
    %v291 = vunpack.c.l.bf16 %v275
    %v292 = vunpack.c.l.bf16 %v276
    %v293 = vunpack.c.l.bf16 %v277
    %v294 = vunpack.c.l.bf16 %v278
    %v295 = vunpack.c.l.bf16 %v279
    %v296 = vunpack.c.l.bf16 %v280
    %v297 = vunpack.c.l.bf16 %v281
    %v298 = vunpack.c.l.bf16 %v282
    %v299 = vstv %s265
    %v300 = vmul.f32 %v299, %v283
    %v301 = vmul.f32 %v299, %v284
    %v302 = vmul.f32 %v299, %v285
    %v303 = vmul.f32 %v299, %v286
    %v304 = vmul.f32 %v299, %v287
    %v305 = vmul.f32 %v299, %v288
    %v306 = vmul.f32 %v299, %v289
    %v307 = vmul.f32 %v299, %v290
    %v308 = vmul.f32 %v299, %v291
    %v309 = vmul.f32 %v299, %v292
    %v310 = vmul.f32 %v299, %v293
    %v311 = vmul.f32 %v299, %v294
    %v312 = vmul.f32 %v299, %v295
    %v313 = vmul.f32 %v299, %v296
    %v314 = vmul.f32 %v299, %v297
    %v315 = vmul.f32 %v299, %v298
    %v316 = vadd.f32 %v249, %v300
    %v317 = vadd.f32 %v250, %v301
    %v318 = vadd.f32 %v251, %v302
    %v319 = vadd.f32 %v252, %v303
    %v320 = vadd.f32 %v253, %v304
    %v321 = vadd.f32 %v254, %v305
    %v322 = vadd.f32 %v255, %v306
    %v323 = vadd.f32 %v256, %v307
    %v324 = vadd.f32 %v257, %v308
    %v325 = vadd.f32 %v258, %v309
    %v326 = vadd.f32 %v259, %v310
    %v327 = vadd.f32 %v260, %v311
    %v328 = vadd.f32 %v261, %v312
    %v329 = vadd.f32 %v262, %v313
    %v330 = vadd.f32 %v263, %v314
    %v331 = vadd.f32 %v264, %v315
    %s332 = sshra.s32 %s80, 3
    %s333 = sand.u32 %s80, 7
    %s334 = smul.addr %s332, 4
    %s335 = scalar_lea.vmem [#allocation8], %s334
    %v336 = vld [vmem:[%s335] sm:$0xf]
    %v337 = vld [vmem:[%s335 + $0x4] sm:$0xf]
    %v338 = vld [vmem:[%s335 + $0x8] sm:$0xf]
    %v339 = vld [vmem:[%s335 + $0xc] sm:$0xf]
    %v340 = vld [vmem:[%s335 + $0x10] sm:$0xf]
    %v341 = vld [vmem:[%s335 + $0x14] sm:$0xf]
    %v342 = vld [vmem:[%s335 + $0x18] sm:$0xf]
    %v343 = vld [vmem:[%s335 + $0x1c] sm:$0xf]
    %v344 = vld [vmem:[%s335 + $0x20] sm:$0xf]
    %v345 = vld [vmem:[%s335 + $0x24] sm:$0xf]
    %v346 = vld [vmem:[%s335 + $0x28] sm:$0xf]
    %v347 = vld [vmem:[%s335 + $0x2c] sm:$0xf]
    %v348 = vld [vmem:[%s335 + $0x30] sm:$0xf]
    %v349 = vld [vmem:[%s335 + $0x34] sm:$0xf]
    %v350 = vld [vmem:[%s335 + $0x38] sm:$0xf]
    %v351 = vld [vmem:[%s335 + $0x3c] sm:$0xf]
    %v352 = vld [vmem:[#allocation2] sm:$0xff]
    %v353 = vld [vmem:[#allocation2 + $0x8] sm:$0xff]
    %v354 = vld [vmem:[#allocation2 + $0x10] sm:$0xff]
    %v355 = vld [vmem:[#allocation2 + $0x18] sm:$0xff]
    %v356 = vld [vmem:[#allocation2 + $0x20] sm:$0xff]
    %v357 = vld [vmem:[#allocation2 + $0x28] sm:$0xff]
    %v358 = vld [vmem:[#allocation2 + $0x30] sm:$0xff]
    %v359 = vld [vmem:[#allocation2 + $0x38] sm:$0xff]
    %v360 = vld [vmem:[#allocation2 + $0x40] sm:$0xff]
    %v361 = vld [vmem:[#allocation2 + $0x48] sm:$0xff]
    %v362 = vld [vmem:[#allocation2 + $0x50] sm:$0xff]
    %v363 = vld [vmem:[#allocation2 + $0x58] sm:$0xff]
    %v364 = vld [vmem:[#allocation2 + $0x60] sm:$0xff]
    %v365 = vld [vmem:[#allocation2 + $0x68] sm:$0xff]
    %v366 = vld [vmem:[#allocation2 + $0x70] sm:$0xff]
    %v367 = vld [vmem:[#allocation2 + $0x78] sm:$0xff]
    %v368 = vpack.c.bf16 %v317, %v316
    %v369 = vpack.c.bf16 %v319, %v318
    %v370 = vpack.c.bf16 %v321, %v320
    %v371 = vpack.c.bf16 %v323, %v322
    %v372 = vpack.c.bf16 %v325, %v324
    %v373 = vpack.c.bf16 %v327, %v326
    %v374 = vpack.c.bf16 %v329, %v328
    %v375 = vpack.c.bf16 %v331, %v330
    %v392 = vunpack.c.l.b16 %v336
    %v393 = vunpack.c.l.b16 %v337
    %v394 = vunpack.c.l.b16 %v338
    %v395 = vunpack.c.l.b16 %v339
    %v396 = vunpack.c.l.b16 %v340
    %v397 = vunpack.c.l.b16 %v341
    %v398 = vunpack.c.l.b16 %v342
    %v399 = vunpack.c.l.b16 %v343
    %v400 = vunpack.c.l.b16 %v344
    %v401 = vunpack.c.l.b16 %v345
    %v402 = vunpack.c.l.b16 %v346
    %v403 = vunpack.c.l.b16 %v347
    %v404 = vunpack.c.l.b16 %v348
    %v405 = vunpack.c.l.b16 %v349
    %v406 = vunpack.c.l.b16 %v350
    %v407 = vunpack.c.l.b16 %v351
    %v408 = vpack.c.b16 %v393, %v392
    %v409 = vpack.c.b16 %v395, %v394
    %v410 = vpack.c.b16 %v397, %v396
    %v411 = vpack.c.b16 %v399, %v398
    %v412 = vpack.c.b16 %v401, %v400
    %v413 = vpack.c.b16 %v403, %v402
    %v414 = vpack.c.b16 %v405, %v404
    %v415 = vpack.c.b16 %v407, %v406
    %424 = vmatpush.bf16.msra.mxu0 %v415
    %425 = vmatpush.bf16.msra.mxu0 %v414
    %426 = vmatpush.bf16.msra.mxu0 %v413
    %427 = vmatpush.bf16.msra.mxu0 %v412
    %428 = vmatpush.bf16.msra.mxu0 %v411
    %429 = vmatpush.bf16.msra.mxu0 %v410
    %430 = vmatpush.bf16.msra.mxu0 %v409
    %431 = vmatpush.bf16.msra.mxu0 %v408
    %432 = vmatmul.bf16.gmra.mxu0 %v368
    %v433 = vpop.f32.mrf.mxu0
    %v434 = vadd.f32 0.0, %v433
    %v435 = vpop.f32.mrf.mxu0
    %v436 = vadd.f32 0.0, %v435
    %437 = vmatmul.bf16.gmra.mxu0 %v369
    %v438 = vpop.f32.mrf.mxu0
    %v439 = vadd.f32 0.0, %v438
    %v440 = vpop.f32.mrf.mxu0
    %v441 = vadd.f32 0.0, %v440
    %442 = vmatmul.bf16.gmra.mxu0 %v370
    %v443 = vpop.f32.mrf.mxu0
    %v444 = vadd.f32 0.0, %v443
    %v445 = vpop.f32.mrf.mxu0
    %v446 = vadd.f32 0.0, %v445
    %447 = vmatmul.bf16.gmra.mxu0 %v371
    %v448 = vpop.f32.mrf.mxu0
    %v449 = vadd.f32 0.0, %v448
    %v450 = vpop.f32.mrf.mxu0
    %v451 = vadd.f32 0.0, %v450
    %452 = vmatmul.bf16.gmra.mxu0 %v372
    %v453 = vpop.f32.mrf.mxu0
    %v454 = vadd.f32 0.0, %v453
    %v455 = vpop.f32.mrf.mxu0
    %v456 = vadd.f32 0.0, %v455
    %457 = vmatmul.bf16.gmra.mxu0 %v373
    %v458 = vpop.f32.mrf.mxu0
    %v459 = vadd.f32 0.0, %v458
    %v460 = vpop.f32.mrf.mxu0
    %v461 = vadd.f32 0.0, %v460
    %462 = vmatmul.bf16.gmra.mxu0 %v374
    %v463 = vpop.f32.mrf.mxu0
    %v464 = vadd.f32 0.0, %v463
    %v465 = vpop.f32.mrf.mxu0
    %v466 = vadd.f32 0.0, %v465
    %467 = vmatmul.bf16.gmra.mxu0 %v375
    %v468 = vpop.f32.mrf.mxu0
    %v469 = vadd.f32 0.0, %v468
    %v470 = vpop.f32.mrf.mxu0
    %v471 = vadd.f32 0.0, %v470
    %472 = vdwg.mxu0
    %v473 = vadd.f32 %v352, %v434
    %v474 = vadd.f32 %v353, %v436
    %v475 = vadd.f32 %v354, %v439
    %v476 = vadd.f32 %v355, %v441
    %v477 = vadd.f32 %v356, %v444
    %v478 = vadd.f32 %v357, %v446
    %v479 = vadd.f32 %v358, %v449
    %v480 = vadd.f32 %v359, %v451
    %v481 = vadd.f32 %v360, %v454
    %v482 = vadd.f32 %v361, %v456
    %v483 = vadd.f32 %v362, %v459
    %v484 = vadd.f32 %v363, %v461
    %v485 = vadd.f32 %v364, %v464
    %v486 = vadd.f32 %v365, %v466
    %v487 = vadd.f32 %v366, %v469
    %v488 = vadd.f32 %v367, %v471
    %489 = vst [vmem:[#allocation2] sm:$0xff] %v473
    %490 = vst [vmem:[#allocation2 + $0x8] sm:$0xff] %v474
    %491 = vst [vmem:[#allocation2 + $0x10] sm:$0xff] %v475
    %492 = vst [vmem:[#allocation2 + $0x18] sm:$0xff] %v476
    %493 = vst [vmem:[#allocation2 + $0x20] sm:$0xff] %v477
    %494 = vst [vmem:[#allocation2 + $0x28] sm:$0xff] %v478
    %495 = vst [vmem:[#allocation2 + $0x30] sm:$0xff] %v479
    %496 = vst [vmem:[#allocation2 + $0x38] sm:$0xff] %v480
    %497 = vst [vmem:[#allocation2 + $0x40] sm:$0xff] %v481
    %498 = vst [vmem:[#allocation2 + $0x48] sm:$0xff] %v482
    %499 = vst [vmem:[#allocation2 + $0x50] sm:$0xff] %v483
    %500 = vst [vmem:[#allocation2 + $0x58] sm:$0xff] %v484
    %501 = vst [vmem:[#allocation2 + $0x60] sm:$0xff] %v485
    %502 = vst [vmem:[#allocation2 + $0x68] sm:$0xff] %v486
    %503 = vst [vmem:[#allocation2 + $0x70] sm:$0xff] %v487
    %504 = vst [vmem:[#allocation2 + $0x78] sm:$0xff] %v488
    %s505 = sld [smem:[#allocation3 + $0x1]]
    %v506 = vld [vmem:[#allocation7] sm:$0xf]
    %v507 = vld [vmem:[#allocation7 + $0x4] sm:$0xf]
    %v508 = vld [vmem:[#allocation7 + $0x8] sm:$0xf]
    %v509 = vld [vmem:[#allocation7 + $0xc] sm:$0xf]
    %v510 = vld [vmem:[#allocation7 + $0x10] sm:$0xf]
    %v511 = vld [vmem:[#allocation7 + $0x14] sm:$0xf]
    %v512 = vld [vmem:[#allocation7 + $0x18] sm:$0xf]
    %v513 = vld [vmem:[#allocation7 + $0x1c] sm:$0xf]
    %v514 = vld [vmem:[#allocation7 + $0x20] sm:$0xf]
    %v515 = vld [vmem:[#allocation7 + $0x24] sm:$0xf]
    %v516 = vld [vmem:[#allocation7 + $0x28] sm:$0xf]
    %v517 = vld [vmem:[#allocation7 + $0x2c] sm:$0xf]
    %v518 = vld [vmem:[#allocation7 + $0x30] sm:$0xf]
    %v519 = vld [vmem:[#allocation7 + $0x34] sm:$0xf]
    %v520 = vld [vmem:[#allocation7 + $0x38] sm:$0xf]
    %v521 = vld [vmem:[#allocation7 + $0x3c] sm:$0xf]
    %v522 = vunpack.c.l.bf16 %v506
    %v523 = vunpack.c.l.bf16 %v507
    %v524 = vunpack.c.l.bf16 %v508
    %v525 = vunpack.c.l.bf16 %v509
    %v526 = vunpack.c.l.bf16 %v510
    %v527 = vunpack.c.l.bf16 %v511
    %v528 = vunpack.c.l.bf16 %v512
    %v529 = vunpack.c.l.bf16 %v513
    %v530 = vunpack.c.l.bf16 %v514
    %v531 = vunpack.c.l.bf16 %v515
    %v532 = vunpack.c.l.bf16 %v516
    %v533 = vunpack.c.l.bf16 %v517
    %v534 = vunpack.c.l.bf16 %v518
    %v535 = vunpack.c.l.bf16 %v519
    %v536 = vunpack.c.l.bf16 %v520
    %v537 = vunpack.c.l.bf16 %v521
    %v538 = vstv %s505
    %v539 = vmul.f32 %v538, %v522
    %v540 = vmul.f32 %v538, %v523
    %v541 = vmul.f32 %v538, %v524
    %v542 = vmul.f32 %v538, %v525
    %v543 = vmul.f32 %v538, %v526
    %v544 = vmul.f32 %v538, %v527
    %v545 = vmul.f32 %v538, %v528
    %v546 = vmul.f32 %v538, %v529
    %v547 = vmul.f32 %v538, %v530
    %v548 = vmul.f32 %v538, %v531
    %v549 = vmul.f32 %v538, %v532
    %v550 = vmul.f32 %v538, %v533
    %v551 = vmul.f32 %v538, %v534
    %v552 = vmul.f32 %v538, %v535
    %v553 = vmul.f32 %v538, %v536
    %v554 = vmul.f32 %v538, %v537
    %s555 = sld [smem:[#allocation3 + $0x3]]
    %v556 = vld [vmem:[%s132] sm:$0xf]
    %v557 = vld [vmem:[%s132 + $0x4] sm:$0xf]
    %v558 = vld [vmem:[%s132 + $0x8] sm:$0xf]
    %v559 = vld [vmem:[%s132 + $0xc] sm:$0xf]
    %v560 = vld [vmem:[%s132 + $0x10] sm:$0xf]
    %v561 = vld [vmem:[%s132 + $0x14] sm:$0xf]
    %v562 = vld [vmem:[%s132 + $0x18] sm:$0xf]
    %v563 = vld [vmem:[%s132 + $0x1c] sm:$0xf]
    %v564 = vld [vmem:[%s132 + $0x20] sm:$0xf]
    %v565 = vld [vmem:[%s132 + $0x24] sm:$0xf]
    %v566 = vld [vmem:[%s132 + $0x28] sm:$0xf]
    %v567 = vld [vmem:[%s132 + $0x2c] sm:$0xf]
    %v568 = vld [vmem:[%s132 + $0x30] sm:$0xf]
    %v569 = vld [vmem:[%s132 + $0x34] sm:$0xf]
    %v570 = vld [vmem:[%s132 + $0x38] sm:$0xf]
    %v571 = vld [vmem:[%s132 + $0x3c] sm:$0xf]
    %v572 = vunpack.c.l.bf16 %v556
    %v573 = vunpack.c.l.bf16 %v557
    %v574 = vunpack.c.l.bf16 %v558
    %v575 = vunpack.c.l.bf16 %v559
    %v576 = vunpack.c.l.bf16 %v560
    %v577 = vunpack.c.l.bf16 %v561
    %v578 = vunpack.c.l.bf16 %v562
    %v579 = vunpack.c.l.bf16 %v563
    %v580 = vunpack.c.l.bf16 %v564
    %v581 = vunpack.c.l.bf16 %v565
    %v582 = vunpack.c.l.bf16 %v566
    %v583 = vunpack.c.l.bf16 %v567
    %v584 = vunpack.c.l.bf16 %v568
    %v585 = vunpack.c.l.bf16 %v569
    %v586 = vunpack.c.l.bf16 %v570
    %v587 = vunpack.c.l.bf16 %v571
    %v588 = vstv %s555
    %v589 = vmul.f32 %v588, %v572
    %v590 = vmul.f32 %v588, %v573
    %v591 = vmul.f32 %v588, %v574
    %v592 = vmul.f32 %v588, %v575
    %v593 = vmul.f32 %v588, %v576
    %v594 = vmul.f32 %v588, %v577
    %v595 = vmul.f32 %v588, %v578
    %v596 = vmul.f32 %v588, %v579
    %v597 = vmul.f32 %v588, %v580
    %v598 = vmul.f32 %v588, %v581
    %v599 = vmul.f32 %v588, %v582
    %v600 = vmul.f32 %v588, %v583
    %v601 = vmul.f32 %v588, %v584
    %v602 = vmul.f32 %v588, %v585
    %v603 = vmul.f32 %v588, %v586
    %v604 = vmul.f32 %v588, %v587
    %v605 = vadd.f32 %v539, %v589
    %v606 = vadd.f32 %v540, %v590
    %v607 = vadd.f32 %v541, %v591
    %v608 = vadd.f32 %v542, %v592
    %v609 = vadd.f32 %v543, %v593
    %v610 = vadd.f32 %v544, %v594
    %v611 = vadd.f32 %v545, %v595
    %v612 = vadd.f32 %v546, %v596
    %v613 = vadd.f32 %v547, %v597
    %v614 = vadd.f32 %v548, %v598
    %v615 = vadd.f32 %v549, %v599
    %v616 = vadd.f32 %v550, %v600
    %v617 = vadd.f32 %v551, %v601
    %v618 = vadd.f32 %v552, %v602
    %v619 = vadd.f32 %v553, %v603
    %v620 = vadd.f32 %v554, %v604
    %s621 = sld [smem:[#allocation3 + $0x5]]
    %v622 = vld [vmem:[%s199] sm:$0xf]
    %v623 = vld [vmem:[%s199 + $0x4] sm:$0xf]
    %v624 = vld [vmem:[%s199 + $0x8] sm:$0xf]
    %v625 = vld [vmem:[%s199 + $0xc] sm:$0xf]
    %v626 = vld [vmem:[%s199 + $0x10] sm:$0xf]
    %v627 = vld [vmem:[%s199 + $0x14] sm:$0xf]
    %v628 = vld [vmem:[%s199 + $0x18] sm:$0xf]
    %v629 = vld [vmem:[%s199 + $0x1c] sm:$0xf]
    %v630 = vld [vmem:[%s199 + $0x20] sm:$0xf]
    %v631 = vld [vmem:[%s199 + $0x24] sm:$0xf]
    %v632 = vld [vmem:[%s199 + $0x28] sm:$0xf]
    %v633 = vld [vmem:[%s199 + $0x2c] sm:$0xf]
    %v634 = vld [vmem:[%s199 + $0x30] sm:$0xf]
    %v635 = vld [vmem:[%s199 + $0x34] sm:$0xf]
    %v636 = vld [vmem:[%s199 + $0x38] sm:$0xf]
    %v637 = vld [vmem:[%s199 + $0x3c] sm:$0xf]
    %v638 = vunpack.c.l.bf16 %v622
    %v639 = vunpack.c.l.bf16 %v623
    %v640 = vunpack.c.l.bf16 %v624
    %v641 = vunpack.c.l.bf16 %v625
    %v642 = vunpack.c.l.bf16 %v626
    %v643 = vunpack.c.l.bf16 %v627
    %v644 = vunpack.c.l.bf16 %v628
    %v645 = vunpack.c.l.bf16 %v629
    %v646 = vunpack.c.l.bf16 %v630
    %v647 = vunpack.c.l.bf16 %v631
    %v648 = vunpack.c.l.bf16 %v632
    %v649 = vunpack.c.l.bf16 %v633
    %v650 = vunpack.c.l.bf16 %v634
    %v651 = vunpack.c.l.bf16 %v635
    %v652 = vunpack.c.l.bf16 %v636
    %v653 = vunpack.c.l.bf16 %v637
    %v654 = vstv %s621
    %v655 = vmul.f32 %v654, %v638
    %v656 = vmul.f32 %v654, %v639
    %v657 = vmul.f32 %v654, %v640
    %v658 = vmul.f32 %v654, %v641
    %v659 = vmul.f32 %v654, %v642
    %v660 = vmul.f32 %v654, %v643
    %v661 = vmul.f32 %v654, %v644
    %v662 = vmul.f32 %v654, %v645
    %v663 = vmul.f32 %v654, %v646
    %v664 = vmul.f32 %v654, %v647
    %v665 = vmul.f32 %v654, %v648
    %v666 = vmul.f32 %v654, %v649
    %v667 = vmul.f32 %v654, %v650
    %v668 = vmul.f32 %v654, %v651
    %v669 = vmul.f32 %v654, %v652
    %v670 = vmul.f32 %v654, %v653
    %v671 = vadd.f32 %v605, %v655
    %v672 = vadd.f32 %v606, %v656
    %v673 = vadd.f32 %v607, %v657
    %v674 = vadd.f32 %v608, %v658
    %v675 = vadd.f32 %v609, %v659
    %v676 = vadd.f32 %v610, %v660
    %v677 = vadd.f32 %v611, %v661
    %v678 = vadd.f32 %v612, %v662
    %v679 = vadd.f32 %v613, %v663
    %v680 = vadd.f32 %v614, %v664
    %v681 = vadd.f32 %v615, %v665
    %v682 = vadd.f32 %v616, %v666
    %v683 = vadd.f32 %v617, %v667
    %v684 = vadd.f32 %v618, %v668
    %v685 = vadd.f32 %v619, %v669
    %v686 = vadd.f32 %v620, %v670
    %s687 = sld [smem:[#allocation3 + $0x7]]
    %v688 = vld [vmem:[%s266] sm:$0xf]
    %v689 = vld [vmem:[%s266 + $0x4] sm:$0xf]
    %v690 = vld [vmem:[%s266 + $0x8] sm:$0xf]
    %v691 = vld [vmem:[%s266 + $0xc] sm:$0xf]
    %v692 = vld [vmem:[%s266 + $0x10] sm:$0xf]
    %v693 = vld [vmem:[%s266 + $0x14] sm:$0xf]
    %v694 = vld [vmem:[%s266 + $0x18] sm:$0xf]
    %v695 = vld [vmem:[%s266 + $0x1c] sm:$0xf]
    %v696 = vld [vmem:[%s266 + $0x20] sm:$0xf]
    %v697 = vld [vmem:[%s266 + $0x24] sm:$0xf]
    %v698 = vld [vmem:[%s266 + $0x28] sm:$0xf]
    %v699 = vld [vmem:[%s266 + $0x2c] sm:$0xf]
    %v700 = vld [vmem:[%s266 + $0x30] sm:$0xf]
    %v701 = vld [vmem:[%s266 + $0x34] sm:$0xf]
    %v702 = vld [vmem:[%s266 + $0x38] sm:$0xf]
    %v703 = vld [vmem:[%s266 + $0x3c] sm:$0xf]
    %v704 = vunpack.c.l.bf16 %v688
    %v705 = vunpack.c.l.bf16 %v689
    %v706 = vunpack.c.l.bf16 %v690
    %v707 = vunpack.c.l.bf16 %v691
    %v708 = vunpack.c.l.bf16 %v692
    %v709 = vunpack.c.l.bf16 %v693
    %v710 = vunpack.c.l.bf16 %v694
    %v711 = vunpack.c.l.bf16 %v695
    %v712 = vunpack.c.l.bf16 %v696
    %v713 = vunpack.c.l.bf16 %v697
    %v714 = vunpack.c.l.bf16 %v698
    %v715 = vunpack.c.l.bf16 %v699
    %v716 = vunpack.c.l.bf16 %v700
    %v717 = vunpack.c.l.bf16 %v701
    %v718 = vunpack.c.l.bf16 %v702
    %v719 = vunpack.c.l.bf16 %v703
    %v720 = vstv %s687
    %v721 = vmul.f32 %v720, %v704
    %v722 = vmul.f32 %v720, %v705
    %v723 = vmul.f32 %v720, %v706
    %v724 = vmul.f32 %v720, %v707
    %v725 = vmul.f32 %v720, %v708
    %v726 = vmul.f32 %v720, %v709
    %v727 = vmul.f32 %v720, %v710
    %v728 = vmul.f32 %v720, %v711
    %v729 = vmul.f32 %v720, %v712
    %v730 = vmul.f32 %v720, %v713
    %v731 = vmul.f32 %v720, %v714
    %v732 = vmul.f32 %v720, %v715
    %v733 = vmul.f32 %v720, %v716
    %v734 = vmul.f32 %v720, %v717
    %v735 = vmul.f32 %v720, %v718
    %v736 = vmul.f32 %v720, %v719
    %v737 = vadd.f32 %v671, %v721
    %v738 = vadd.f32 %v672, %v722
    %v739 = vadd.f32 %v673, %v723
    %v740 = vadd.f32 %v674, %v724
    %v741 = vadd.f32 %v675, %v725
    %v742 = vadd.f32 %v676, %v726
    %v743 = vadd.f32 %v677, %v727
    %v744 = vadd.f32 %v678, %v728
    %v745 = vadd.f32 %v679, %v729
    %v746 = vadd.f32 %v680, %v730
    %v747 = vadd.f32 %v681, %v731
    %v748 = vadd.f32 %v682, %v732
    %v749 = vadd.f32 %v683, %v733
    %v750 = vadd.f32 %v684, %v734
    %v751 = vadd.f32 %v685, %v735
    %v752 = vadd.f32 %v686, %v736
    %s753 = sadd.s32 %s332, 16
    %s754 = smul.addr %s753, 4
    %s755 = scalar_lea.vmem [#allocation8], %s754
    %v756 = vld [vmem:[%s755] sm:$0xf]
    %v757 = vld [vmem:[%s755 + $0x4] sm:$0xf]
    %v758 = vld [vmem:[%s755 + $0x8] sm:$0xf]
    %v759 = vld [vmem:[%s755 + $0xc] sm:$0xf]
    %v760 = vld [vmem:[%s755 + $0x10] sm:$0xf]
    %v761 = vld [vmem:[%s755 + $0x14] sm:$0xf]
    %v762 = vld [vmem:[%s755 + $0x18] sm:$0xf]
    %v763 = vld [vmem:[%s755 + $0x1c] sm:$0xf]
    %v764 = vld [vmem:[%s755 + $0x20] sm:$0xf]
    %v765 = vld [vmem:[%s755 + $0x24] sm:$0xf]
    %v766 = vld [vmem:[%s755 + $0x28] sm:$0xf]
    %v767 = vld [vmem:[%s755 + $0x2c] sm:$0xf]
    %v768 = vld [vmem:[%s755 + $0x30] sm:$0xf]
    %v769 = vld [vmem:[%s755 + $0x34] sm:$0xf]
    %v770 = vld [vmem:[%s755 + $0x38] sm:$0xf]
    %v771 = vld [vmem:[%s755 + $0x3c] sm:$0xf]
    %v772 = vld [vmem:[#allocation2] sm:$0xff]
    %v773 = vld [vmem:[#allocation2 + $0x8] sm:$0xff]
    %v774 = vld [vmem:[#allocation2 + $0x10] sm:$0xff]
    %v775 = vld [vmem:[#allocation2 + $0x18] sm:$0xff]
    %v776 = vld [vmem:[#allocation2 + $0x20] sm:$0xff]
    %v777 = vld [vmem:[#allocation2 + $0x28] sm:$0xff]
    %v778 = vld [vmem:[#allocation2 + $0x30] sm:$0xff]
    %v779 = vld [vmem:[#allocation2 + $0x38] sm:$0xff]
    %v780 = vld [vmem:[#allocation2 + $0x40] sm:$0xff]
    %v781 = vld [vmem:[#allocation2 + $0x48] sm:$0xff]
    %v782 = vld [vmem:[#allocation2 + $0x50] sm:$0xff]
    %v783 = vld [vmem:[#allocation2 + $0x58] sm:$0xff]
    %v784 = vld [vmem:[#allocation2 + $0x60] sm:$0xff]
    %v785 = vld [vmem:[#allocation2 + $0x68] sm:$0xff]
    %v786 = vld [vmem:[#allocation2 + $0x70] sm:$0xff]
    %v787 = vld [vmem:[#allocation2 + $0x78] sm:$0xff]
    %v788 = vpack.c.bf16 %v738, %v737
    %v789 = vpack.c.bf16 %v740, %v739
    %v790 = vpack.c.bf16 %v742, %v741
    %v791 = vpack.c.bf16 %v744, %v743
    %v792 = vpack.c.bf16 %v746, %v745
    %v793 = vpack.c.bf16 %v748, %v747
    %v794 = vpack.c.bf16 %v750, %v749
    %v795 = vpack.c.bf16 %v752, %v751
    %v812 = vunpack.c.l.b16 %v756
    %v813 = vunpack.c.l.b16 %v757
    %v814 = vunpack.c.l.b16 %v758
    %v815 = vunpack.c.l.b16 %v759
    %v816 = vunpack.c.l.b16 %v760
    %v817 = vunpack.c.l.b16 %v761
    %v818 = vunpack.c.l.b16 %v762
    %v819 = vunpack.c.l.b16 %v763
    %v820 = vunpack.c.l.b16 %v764
    %v821 = vunpack.c.l.b16 %v765
    %v822 = vunpack.c.l.b16 %v766
    %v823 = vunpack.c.l.b16 %v767
    %v824 = vunpack.c.l.b16 %v768
    %v825 = vunpack.c.l.b16 %v769
    %v826 = vunpack.c.l.b16 %v770
    %v827 = vunpack.c.l.b16 %v771
    %v828 = vpack.c.b16 %v813, %v812
    %v829 = vpack.c.b16 %v815, %v814
    %v830 = vpack.c.b16 %v817, %v816
    %v831 = vpack.c.b16 %v819, %v818
    %v832 = vpack.c.b16 %v821, %v820
    %v833 = vpack.c.b16 %v823, %v822
    %v834 = vpack.c.b16 %v825, %v824
    %v835 = vpack.c.b16 %v827, %v826
    %844 = vmatpush.bf16.msra.mxu0 %v835
    %845 = vmatpush.bf16.msra.mxu0 %v834
    %846 = vmatpush.bf16.msra.mxu0 %v833
    %847 = vmatpush.bf16.msra.mxu0 %v832
    %848 = vmatpush.bf16.msra.mxu0 %v831
    %849 = vmatpush.bf16.msra.mxu0 %v830
    %850 = vmatpush.bf16.msra.mxu0 %v829
    %851 = vmatpush.bf16.msra.mxu0 %v828
    %852 = vmatmul.bf16.gmra.mxu0 %v788
    %v853 = vpop.f32.mrf.mxu0
    %v854 = vadd.f32 0.0, %v853
    %v855 = vpop.f32.mrf.mxu0
    %v856 = vadd.f32 0.0, %v855
    %857 = vmatmul.bf16.gmra.mxu0 %v789
    %v858 = vpop.f32.mrf.mxu0
    %v859 = vadd.f32 0.0, %v858
    %v860 = vpop.f32.mrf.mxu0
    %v861 = vadd.f32 0.0, %v860
    %862 = vmatmul.bf16.gmra.mxu0 %v790
    %v863 = vpop.f32.mrf.mxu0
    %v864 = vadd.f32 0.0, %v863
    %v865 = vpop.f32.mrf.mxu0
    %v866 = vadd.f32 0.0, %v865
    %867 = vmatmul.bf16.gmra.mxu0 %v791
    %v868 = vpop.f32.mrf.mxu0
    %v869 = vadd.f32 0.0, %v868
    %v870 = vpop.f32.mrf.mxu0
    %v871 = vadd.f32 0.0, %v870
    %872 = vmatmul.bf16.gmra.mxu0 %v792
    %v873 = vpop.f32.mrf.mxu0
    %v874 = vadd.f32 0.0, %v873
    %v875 = vpop.f32.mrf.mxu0
    %v876 = vadd.f32 0.0, %v875
    %877 = vmatmul.bf16.gmra.mxu0 %v793
    %v878 = vpop.f32.mrf.mxu0
    %v879 = vadd.f32 0.0, %v878
    %v880 = vpop.f32.mrf.mxu0
    %v881 = vadd.f32 0.0, %v880
    %882 = vmatmul.bf16.gmra.mxu0 %v794
    %v883 = vpop.f32.mrf.mxu0
    %v884 = vadd.f32 0.0, %v883
    %v885 = vpop.f32.mrf.mxu0
    %v886 = vadd.f32 0.0, %v885
    %887 = vmatmul.bf16.gmra.mxu0 %v795
    %v888 = vpop.f32.mrf.mxu0
    %v889 = vadd.f32 0.0, %v888
    %v890 = vpop.f32.mrf.mxu0
    %v891 = vadd.f32 0.0, %v890
    %892 = vdwg.mxu0
    %v893 = vadd.f32 %v772, %v854
    %v894 = vadd.f32 %v773, %v856
    %v895 = vadd.f32 %v774, %v859
    %v896 = vadd.f32 %v775, %v861
    %v897 = vadd.f32 %v776, %v864
    %v898 = vadd.f32 %v777, %v866
    %v899 = vadd.f32 %v778, %v869
    %v900 = vadd.f32 %v779, %v871
    %v901 = vadd.f32 %v780, %v874
    %v902 = vadd.f32 %v781, %v876
    %v903 = vadd.f32 %v782, %v879
    %v904 = vadd.f32 %v783, %v881
    %v905 = vadd.f32 %v784, %v884
    %v906 = vadd.f32 %v785, %v886
    %v907 = vadd.f32 %v786, %v889
    %v908 = vadd.f32 %v787, %v891
    %909 = vst [vmem:[#allocation2] sm:$0xff] %v893
    %910 = vst [vmem:[#allocation2 + $0x8] sm:$0xff] %v894
    %911 = vst [vmem:[#allocation2 + $0x10] sm:$0xff] %v895
    %912 = vst [vmem:[#allocation2 + $0x18] sm:$0xff] %v896
    %913 = vst [vmem:[#allocation2 + $0x20] sm:$0xff] %v897
    %914 = vst [vmem:[#allocation2 + $0x28] sm:$0xff] %v898
    %915 = vst [vmem:[#allocation2 + $0x30] sm:$0xff] %v899
    %916 = vst [vmem:[#allocation2 + $0x38] sm:$0xff] %v900
    %917 = vst [vmem:[#allocation2 + $0x40] sm:$0xff] %v901
    %918 = vst [vmem:[#allocation2 + $0x48] sm:$0xff] %v902
    %919 = vst [vmem:[#allocation2 + $0x50] sm:$0xff] %v903
    %920 = vst [vmem:[#allocation2 + $0x58] sm:$0xff] %v904
    %921 = vst [vmem:[#allocation2 + $0x60] sm:$0xff] %v905
    %922 = vst [vmem:[#allocation2 + $0x68] sm:$0xff] %v906
    %923 = vst [vmem:[#allocation2 + $0x70] sm:$0xff] %v907
    %924 = vst [vmem:[#allocation2 + $0x78] sm:$0xff] %v908
    // Predicated region
    $region30: #{tpu_custom_call.1} parent=1 // pred_check
      %p925 = pneg %p60
    $region31: #{tpu_custom_call.1} parent=1 // pred_check_branch
      %927 = sbr.rel (%p925) target = $region33
    $region32: #{tpu_custom_call.1} parent=1 // pred_region
      %v928 = vld [vmem:[#allocation2] sm:$0xff]
      %v929 = vld [vmem:[#allocation2 + $0x8] sm:$0xff]
      %v930 = vld [vmem:[#allocation2 + $0x10] sm:$0xff]
      %v931 = vld [vmem:[#allocation2 + $0x18] sm:$0xff]
      %v932 = vld [vmem:[#allocation2 + $0x20] sm:$0xff]
      %v933 = vld [vmem:[#allocation2 + $0x28] sm:$0xff]
      %v934 = vld [vmem:[#allocation2 + $0x30] sm:$0xff]
      %v935 = vld [vmem:[#allocation2 + $0x38] sm:$0xff]
      %v936 = vld [vmem:[#allocation2 + $0x40] sm:$0xff]
      %v937 = vld [vmem:[#allocation2 + $0x48] sm:$0xff]
      %v938 = vld [vmem:[#allocation2 + $0x50] sm:$0xff]
      %v939 = vld [vmem:[#allocation2 + $0x58] sm:$0xff]
      %v940 = vld [vmem:[#allocation2 + $0x60] sm:$0xff]
      %v941 = vld [vmem:[#allocation2 + $0x68] sm:$0xff]
      %v942 = vld [vmem:[#allocation2 + $0x70] sm:$0xff]
      %v943 = vld [vmem:[#allocation2 + $0x78] sm:$0xff]
      %v944 = vmax.f32 %v928, 0.0
      %v945 = vmax.f32 %v929, 0.0
      %v946 = vmax.f32 %v930, 0.0
      %v947 = vmax.f32 %v931, 0.0
      %v948 = vmax.f32 %v932, 0.0
      %v949 = vmax.f32 %v933, 0.0
      %v950 = vmax.f32 %v934, 0.0
      %v951 = vmax.f32 %v935, 0.0
      %v952 = vmax.f32 %v936, 0.0
      %v953 = vmax.f32 %v937, 0.0
      %v954 = vmax.f32 %v938, 0.0
      %v955 = vmax.f32 %v939, 0.0
      %v956 = vmax.f32 %v940, 0.0
      %v957 = vmax.f32 %v941, 0.0
      %v958 = vmax.f32 %v942, 0.0
      %v959 = vmax.f32 %v943, 0.0
      %v960 = vpack.c.bf16 %v944, %v944
      %v961 = vpack.c.bf16 %v945, %v945
      %v962 = vpack.c.bf16 %v946, %v946
      %v963 = vpack.c.bf16 %v947, %v947
      %v964 = vpack.c.bf16 %v948, %v948
      %v965 = vpack.c.bf16 %v949, %v949
      %v966 = vpack.c.bf16 %v950, %v950
      %v967 = vpack.c.bf16 %v951, %v951
      %v968 = vpack.c.bf16 %v952, %v952
      %v969 = vpack.c.bf16 %v953, %v953
      %v970 = vpack.c.bf16 %v954, %v954
      %v971 = vpack.c.bf16 %v955, %v955
      %v972 = vpack.c.bf16 %v956, %v956
      %v973 = vpack.c.bf16 %v957, %v957
      %v974 = vpack.c.bf16 %v958, %v958
      %v975 = vpack.c.bf16 %v959, %v959
      %976 = vst [vmem:[#allocation10] sm:$0xf] %v960
      %977 = vst [vmem:[#allocation10 + $0x4] sm:$0xf] %v961
      %978 = vst [vmem:[#allocation10 + $0x8] sm:$0xf] %v962
      %979 = vst [vmem:[#allocation10 + $0xc] sm:$0xf] %v963
      %980 = vst [vmem:[#allocation10 + $0x10] sm:$0xf] %v964
      %981 = vst [vmem:[#allocation10 + $0x14] sm:$0xf] %v965
      %982 = vst [vmem:[#allocation10 + $0x18] sm:$0xf] %v966
      %983 = vst [vmem:[#allocation10 + $0x1c] sm:$0xf] %v967
      %984 = vst [vmem:[#allocation10 + $0x20] sm:$0xf] %v968
      %985 = vst [vmem:[#allocation10 + $0x24] sm:$0xf] %v969
      %986 = vst [vmem:[#allocation10 + $0x28] sm:$0xf] %v970
      %987 = vst [vmem:[#allocation10 + $0x2c] sm:$0xf] %v971
      %988 = vst [vmem:[#allocation10 + $0x30] sm:$0xf] %v972
      %989 = vst [vmem:[#allocation10 + $0x34] sm:$0xf] %v973
      %990 = vst [vmem:[#allocation10 + $0x38] sm:$0xf] %v974
      %991 = vst [vmem:[#allocation10 + $0x3c] sm:$0xf] %v975
    $region33: #{tpu_custom_call.1} parent=1 // pred_fallthru
      _
    // Predicated region
    $region34: #{tpu_custom_call.1} parent=1 // pred_check
      _
    $region35: #{tpu_custom_call.1} parent=1 // pred_check_branch
      %993 = sbr.rel (0) target = $region37
    $region36: #{tpu_custom_call.1} parent=1 // pred_region
      %995 = vsyncadd [#allocation5], 0
      %s996 = sshll.u32 [#allocation10], 4
      %s997 = int_to_ptr.vmem [resolvable:$true] %s996
      %s998 = sshll.u32 %s3, 4
      %s999 = int_to_ptr.hbm [resolvable:$true] %s998
      %1004 = dma.vmem_to_hbm [thread:$0]  %s997, 1024, %s999, [#allocation5], 64, 64, 4
    $region37: #{tpu_custom_call.1} parent=1 // pred_fallthru
      _
    // Predicated region
    $region38: #{tpu_custom_call.1} parent=1 // pred_check
      _
    $region39: #{tpu_custom_call.1} parent=1 // pred_check_branch
      %1006 = sbr.rel (0) target = $region41
    $region40: #{tpu_custom_call.1} parent=1 // pred_region
      %1008 = dma.done [#allocation5], 1024
    $region41: #{tpu_custom_call.1} parent=1 // pred_fallthru
      _
    %1009 = vsyncpa [#allocation4], 1
    %1010 = vsyncpa [#allocation9], 1
    %1011 = vsyncpa [#allocation5], 1
    %1012 = vsyncpa [#allocation6], 1

</llo_original>
